<compile_context>
chip_gen: v7x
topology: tpu7x:2x2x1
jax: 0.10.0
libtpu: 0.0.40
codegen_flags: <defaults>
</compile_context>

<pallas_src>
import jax
import jax.numpy as jnp
from jax import lax
from jax.experimental import pallas as pl
from jax.experimental.pallas import tpu as pltpu

ALPHA = 0.75
GAMMA = 2.0          # hard-coded as a square in the kernel (gamma == 2.0)
THRESHOLD = 0.7

LANES = 128
TM_MAX = 2048        # (2048, 128) f32 tile = 1 MiB per input


def _make_kernel(tm, n_valid, needs_mask):
    """Build the elementwise loss kernel for a fixed tile height / element count."""
    inv = 1.0 / (1.0 - THRESHOLD)

    def kernel(p_ref, t_ref, out_ref):
        p = p_ref[...].astype(jnp.float32)
        t = t_ref[...].astype(jnp.float32)

        # MSELoss(reduction='none')
        diff = p - t
        mse = diff * diff

        # weight_map = where(t > thr, 1 + (t - thr)/(1 - thr), 1)
        #            = 1 + max(t - thr, 0) / (1 - thr)      (fewer VALU ops)
        weight_map = 1.0 + jnp.maximum(t - THRESHOLD, 0.0) * inv

        # focal weight = alpha * (1 - exp(-mse)) ** gamma, gamma == 2
        pt = jnp.exp(-mse)                      # EUP transcendental
        omp = 1.0 - pt
        focal = ALPHA * (omp * omp)

        weighted = mse * weight_map * focal

        if needs_mask:
            # Zero the out-of-range tail (partial last tile / lane padding).
            # NOTE: int32 flat index is fine for loss maps < ~2**31 elements.
            row0 = pl.program_id(0) * tm
            row_idx = row0 + lax.broadcasted_iota(jnp.int32, weighted.shape, 0)
            lane_idx = lax.broadcasted_iota(jnp.int32, weighted.shape, 1)
            flat_idx = row_idx * LANES + lane_idx
            weighted = jnp.where(flat_idx < n_valid, weighted, 0.0)

        # Per-program partial sums, kept vreg-shaped (8, 128): the reduction
        # over the major axis is pure VPU vreg adds (no XLU), and the store is
        # a full unmasked (8, 128) block.
        partial = jnp.sum(weighted.reshape(tm // 8, 8, LANES), axis=0)
        out_ref[...] = partial[None]            # (1, 8, 128)

    return kernel


def stress_concentration_loss(pred, target):
    """Mean of weighted focal-MSE loss, matching StressConcentrationLoss.forward."""
    assert pred.shape == target.shape
    n_elems = pred.size

    p_flat = pred.reshape(-1)
    t_flat = target.reshape(-1)

    # Only pad (by < 128 elements) when the flat size is not lane-aligned so
    # the slab reshapes to (rows, 128); the tail is masked in-kernel anyway.
    rem = n_elems % LANES
    if rem:
        p_flat = jnp.pad(p_flat, (0, LANES - rem))
        t_flat = jnp.pad(t_flat, (0, LANES - rem))
    rows = p_flat.size // LANES

    # Big streaming tiles; rounded to a multiple of 16 so any dtype's sublane
    # tiling (f32: 8, bf16: 16) is satisfied.
    tm = min(TM_MAX, ((rows + 15) // 16) * 16)
    num_tiles = -(-rows // tm)
    needs_mask = (num_tiles * tm * LANES) != n_elems

    p2 = p_flat.reshape(rows, LANES)
    t2 = t_flat.reshape(rows, LANES)

    kernel = _make_kernel(tm, n_elems, needs_mask)

    partials = pl.pallas_call(
        kernel,
        out_shape=jax.ShapeDtypeStruct((num_tiles, 8, LANES), jnp.float32),
        grid_spec=pltpu.PrefetchScalarGridSpec(
            num_scalar_prefetch=0,
            grid=(num_tiles,),
            in_specs=[
                pl.BlockSpec((tm, LANES), lambda i: (i, 0)),
                pl.BlockSpec((tm, LANES), lambda i: (i, 0)),
            ],
            out_specs=pl.BlockSpec((1, 8, LANES), lambda i: (i, 0, 0)),
        ),
        compiler_params=pltpu.CompilerParams(
            dimension_semantics=("parallel",)),
    )(p2, t2)

    return jnp.sum(partials) / jnp.float32(n_elems)


def _reference(pred, target):
    mse = (pred - target) ** 2
    weight_map = jnp.where(target > THRESHOLD,
                           1.0 + (target - THRESHOLD) * (1.0 / (1.0 - THRESHOLD)),
                           jnp.ones_like(target))
    pt = jnp.exp(-mse)
    focal = ALPHA * (1.0 - pt) ** GAMMA
    return jnp.mean(mse * weight_map * focal)


if __name__ == "__main__":
    key = jax.random.PRNGKey(0)
    k1, k2 = jax.random.split(key)
    # Prediction / target stress maps, NCHW-like shapes, values in [0, 1].
    pred = jax.random.uniform(k1, (2, 4, 16, 16), dtype=jnp.float32)
    target = jax.random.uniform(k2, (2, 4, 16, 16), dtype=jnp.float32)

    loss = stress_concentration_loss(pred, target)
    jax.block_until_ready(loss)

    ref = _reference(pred, target)
    assert jnp.allclose(loss, ref, rtol=1e-5, atol=1e-6), (loss, ref)
    print("KERNEL_OK")
</pallas_src>

<mosaic_0001>
module attributes {stable_mosaic.version = 11 : i64} {
  func.func @kernel(%arg0: i32, %arg1: memref<16x128xf32, #tpu.memory_space<vmem>>, %arg2: memref<16x128xf32, #tpu.memory_space<vmem>>, %arg3: memref<1x8x128xf32, #tpu.memory_space<vmem>>) attributes {dimension_semantics = [#tpu.dimension_semantics<parallel>], iteration_bounds = array<i64: 1>, scalar_prefetch = 0 : i64, scratch_operands = 0 : i64, tpu.core_type = #tpu.core_type<tc>, window_params = [{transform_indices = @transform_0, window_bounds = array<i64: 16, 128>}, {transform_indices = @transform_1, window_bounds = array<i64: 16, 128>}, {transform_indices = @transform_2, window_bounds = array<i64: 1, 8, 128>}]} {
    %c0 = arith.constant 0 : index
    %c0_0 = arith.constant 0 : index
    %0 = vector.load %arg1[%c0, %c0_0] : memref<16x128xf32, #tpu.memory_space<vmem>>, vector<16x128xf32>
    %c0_1 = arith.constant 0 : index
    %c0_2 = arith.constant 0 : index
    %1 = vector.load %arg2[%c0_1, %c0_2] : memref<16x128xf32, #tpu.memory_space<vmem>>, vector<16x128xf32>
    %2 = arith.subf %0, %1 : vector<16x128xf32>
    %3 = arith.mulf %2, %2 : vector<16x128xf32>
    %cst = arith.constant 0.699999988 : f32
    %4 = vector.broadcast %cst : f32 to vector<16x128xf32>
    %5 = arith.subf %1, %4 : vector<16x128xf32>
    %cst_3 = arith.constant 0.000000e+00 : f32
    %6 = vector.broadcast %cst_3 : f32 to vector<16x128xf32>
    %7 = arith.maximumf %5, %6 : vector<16x128xf32>
    %cst_4 = arith.constant 3.33333325 : f32
    %8 = vector.broadcast %cst_4 : f32 to vector<16x128xf32>
    %9 = arith.mulf %7, %8 : vector<16x128xf32>
    %cst_5 = arith.constant 1.000000e+00 : f32
    %10 = vector.broadcast %cst_5 : f32 to vector<16x128xf32>
    %11 = arith.addf %10, %9 : vector<16x128xf32>
    %cst_6 = arith.constant 0.000000e+00 : f32
    %12 = vector.broadcast %cst_6 : f32 to vector<16x128xf32>
    %13 = arith.subf %12, %3 : vector<16x128xf32>
    %14 = math.exp %13 : vector<16x128xf32>
    %cst_7 = arith.constant 1.000000e+00 : f32
    %15 = vector.broadcast %cst_7 : f32 to vector<16x128xf32>
    %16 = arith.subf %15, %14 : vector<16x128xf32>
    %17 = arith.mulf %16, %16 : vector<16x128xf32>
    %cst_8 = arith.constant 7.500000e-01 : f32
    %18 = vector.broadcast %cst_8 : f32 to vector<16x128xf32>
    %19 = arith.mulf %18, %17 : vector<16x128xf32>
    %20 = arith.mulf %3, %11 : vector<16x128xf32>
    %21 = arith.mulf %20, %19 : vector<16x128xf32>
    %22 = vector.shape_cast %21 : vector<16x128xf32> to vector<2x8x128xf32>
    %cst_9 = arith.constant dense<0.000000e+00> : vector<8x128xf32>
    %23 = vector.multi_reduction <add>, %22, %cst_9 [0] : vector<2x8x128xf32> to vector<8x128xf32>
    %24 = vector.shape_cast %23 : vector<8x128xf32> to vector<1x8x128xf32>
    %c0_10 = arith.constant 0 : index
    %c0_11 = arith.constant 0 : index
    %c0_12 = arith.constant 0 : index
    %25 = vector.load %arg3[%c0_10, %c0_11, %c0_12] : memref<1x8x128xf32, #tpu.memory_space<vmem>>, vector<1x8x128xf32>
    tpu.vector_store %arg3[%c0_10, %c0_11, %c0_12], %24 {strides = array<i32>} : memref<1x8x128xf32, #tpu.memory_space<vmem>>, vector<1x8x128xf32>,
    return
  }
  func.func @transform_0(%arg0: i32) -> (i32, i32) {
    %c0_i32 = arith.constant 0 : i32
    %c0_i32_0 = arith.constant 0 : i32
    return %arg0, %c0_i32 : i32, i32
  }
  func.func @transform_1(%arg0: i32) -> (i32, i32) {
    %c0_i32 = arith.constant 0 : i32
    %c0_i32_0 = arith.constant 0 : i32
    return %arg0, %c0_i32 : i32, i32
  }
  func.func @transform_2(%arg0: i32) -> (i32, i32, i32) {
    %c0_i32 = arith.constant 0 : i32
    %c0_i32_0 = arith.constant 0 : i32
    %c0_i32_1 = arith.constant 0 : i32
    return %arg0, %c0_i32, %c0_i32_0 : i32, i32, i32
  }
}

</mosaic_0001>

<llo_original>
// kernel: tpu_custom_call.1
$region0: #{tpu_custom_call.1}
  #allocation0 [shape = 'u32[]', space=smem, size = 0x4, offset = 0x4, fixed_abs, tag = 'smem constant byte address 0x4 - core index']
  #allocation1 [shape = 'u32[144,128]{1,0:T(1,128)}', space=vmem, size = 0x12000, scoped, tag = 'internal scratch']
  %s0 = inlined_call_operand.hbm [shape: f32[16,128], index: 0, kind: input, shape index: {}]
  %s1 = inlined_call_operand.hbm [shape: f32[16,128], index: 1, kind: input, shape index: {}]
  %s2 = inlined_call_operand.hbm [shape: f32[1,8,128], index: 2, kind: output, shape index: {}]
  %s3 = sld [smem:[#allocation0]]
  $region26: #{tpu_custom_call.1} parent=0
    _
  %s5 = ssub.s32 1, %s3
  %s6 = scalar_select 0, %s5, %s3
  $region1: #{tpu_custom_call.1} parent=0
    #allocation2 [shape = 'u8[8192]{0}', space=vmem, size = 0x2000, scoped, tag = 'input window, operand 0, single buffered']
    #allocation3 [shape = 's32[1]{0}', space=sflag, size = 0x4, scoped, tag = 'scoped memory for tpu_custom_call.1']
    #allocation4 [shape = 's32[1]{0}', space=sflag, size = 0x4, scoped, tag = 'scoped memory for tpu_custom_call.1']
    #allocation5 [shape = 'u8[8192]{0}', space=vmem, size = 0x2000, scoped, tag = 'input window, operand 1, single buffered']
    #allocation6 [shape = 's32[1]{0}', space=sflag, size = 0x4, scoped, tag = 'scoped memory for tpu_custom_call.1']
    #allocation7 [shape = 'u8[4096]{0}', space=vmem, size = 0x1000, scoped, tag = 'output window, operand 0, single buffered']
    %7 = vsyncpa [#allocation3], 0
    %8 = vsyncpa [#allocation6], 0
    %9 = vsyncpa [#allocation4], 0
    // Predicated region
    $region2: #{tpu_custom_call.1} parent=1 // pred_check
      _
    $region3: #{tpu_custom_call.1} parent=1 // pred_check_branch
      %11 = sbr.rel (0) target = $region5
    $region4: #{tpu_custom_call.1} parent=1 // pred_region
      %s13 = ssub.s32 256, 256
      %14 = vsyncadd [#allocation3], %s13
      %s15 = sshll.u32 [#allocation2], 4
      %s16 = int_to_ptr.vmem [resolvable:$true] %s15
      %21 = dma.hbm_to_vmem [thread:$0]  %s0, 256, %s16, [#allocation3], 128, 128, 8
    $region5: #{tpu_custom_call.1} parent=1 // pred_fallthru
      _
    // Predicated region
    $region6: #{tpu_custom_call.1} parent=1 // pred_check
      _
    $region7: #{tpu_custom_call.1} parent=1 // pred_check_branch
      %23 = sbr.rel (0) target = $region9
    $region8: #{tpu_custom_call.1} parent=1 // pred_region
      %s25 = ssub.s32 256, 256
      %26 = vsyncadd [#allocation6], %s25
      %s27 = sshll.u32 [#allocation5], 4
      %s28 = int_to_ptr.vmem [resolvable:$true] %s27
      %33 = dma.hbm_to_vmem [thread:$0]  %s1, 256, %s28, [#allocation6], 128, 128, 8
    $region9: #{tpu_custom_call.1} parent=1 // pred_fallthru
      _
    // Predicated region
    $region10: #{tpu_custom_call.1} parent=1 // pred_check
      _
    $region11: #{tpu_custom_call.1} parent=1 // pred_check_branch
      %35 = sbr.rel (0) target = $region13
    $region12: #{tpu_custom_call.1} parent=1 // pred_region
      %36 = dma.done [#allocation3], 256
    $region13: #{tpu_custom_call.1} parent=1 // pred_fallthru
      _
    // Predicated region
    $region14: #{tpu_custom_call.1} parent=1 // pred_check
      _
    $region15: #{tpu_custom_call.1} parent=1 // pred_check_branch
      %38 = sbr.rel (0) target = $region17
    $region16: #{tpu_custom_call.1} parent=1 // pred_region
      %39 = dma.done [#allocation6], 256
    $region17: #{tpu_custom_call.1} parent=1 // pred_fallthru
      _
    %v40 = vld [vmem:[#allocation2] sm:$0xff]
    %v41 = vld [vmem:[#allocation2 + $0x8] sm:$0xff]
    %v42 = vld [vmem:[#allocation5] sm:$0xff]
    %v43 = vld [vmem:[#allocation5 + $0x8] sm:$0xff]
    %v44 = vsub.f32 %v40, %v42
    %v45 = vsub.f32 %v41, %v43
    %v46 = vmul.f32 %v44, %v44
    %v47 = vmul.f32 %v45, %v45
    %v48 = vsub.f32 %v42, 0.7
    %v49 = vsub.f32 %v43, 0.7
    %v50 = vmax.f32 %v48, 0.0
    %v51 = vmax.f32 %v49, 0.0
    %v52 = vmul.f32 %v50, 3.3333333
    %v53 = vmul.f32 %v51, 3.3333333
    %v54 = vadd.f32 %v52, 1.0
    %v55 = vadd.f32 %v53, 1.0
    %v56 = vsub.f32 0.0, %v46
    %v57 = vsub.f32 0.0, %v47
    %v58 = vmul.f32 %v56, 1.442695
    %v59 = vpow.pop %v58
    %v60 = vmul.f32 %v57, 1.442695
    %v61 = vpow.pop %v60
    %v62 = vsub.f32 1.0, %v59
    %v63 = vsub.f32 1.0, %v61
    %v64 = vmul.f32 %v62, %v62
    %v65 = vmul.f32 %v63, %v63
    %v66 = vmul.f32 %v64, 0.75
    %v67 = vmul.f32 %v65, 0.75
    %v68 = vmul.f32 %v46, %v54
    %v69 = vmul.f32 %v47, %v55
    %v70 = vmul.f32 %v68, %v66
    %v71 = vmul.f32 %v69, %v67
    %v72 = vadd.f32 %v70, %v71
    %73 = vst [vmem:[#allocation7] sm:$0xff] %v72
    // Predicated region
    $region18: #{tpu_custom_call.1} parent=1 // pred_check
      _
    $region19: #{tpu_custom_call.1} parent=1 // pred_check_branch
      %75 = sbr.rel (0) target = $region21
    $region20: #{tpu_custom_call.1} parent=1 // pred_region
      %s77 = ssub.s32 128, 128
      %78 = vsyncadd [#allocation4], %s77
      %s80 = sshll.u32 [#allocation7], 4
      %s81 = int_to_ptr.vmem [resolvable:$true] %s80
      %83 = dma.vmem_to_hbm [thread:$0]  %s81, 128, %s2, [#allocation4]
    $region21: #{tpu_custom_call.1} parent=1 // pred_fallthru
      _
    // Predicated region
    $region22: #{tpu_custom_call.1} parent=1 // pred_check
      _
    $region23: #{tpu_custom_call.1} parent=1 // pred_check_branch
      %85 = sbr.rel (0) target = $region25
    $region24: #{tpu_custom_call.1} parent=1 // pred_region
      %86 = dma.done [#allocation4], 128
    $region25: #{tpu_custom_call.1} parent=1 // pred_fallthru
      _
    %87 = vsyncpa [#allocation3], 1
    %88 = vsyncpa [#allocation6], 1
    %89 = vsyncpa [#allocation4], 1

</llo_original>
